<compile_context>
chip_gen: v7x
topology: tpu7x:2x2x1
jax: 0.10.0
libtpu: 0.0.40
codegen_flags: <defaults>
</compile_context>

<pallas_src>
import jax
import jax.numpy as jnp
from jax.experimental import pallas as pl
from jax.experimental.pallas import tpu as pltpu


def mlp_kernel(xT_ref, w1_ref, b1_ref, w2_ref, b2_ref, yT_ref, hT_ref, zT_ref):
    xT = xT_ref[...]                         # (D_in, TN)  batch on lanes
    w1 = w1_ref[...]                         # (H, D_in)   PyTorch Linear layout
    d_in = w1.shape[1]

    # Layer 1: z^T = W1 @ x^T + b1.  K = D_in is tiny, so skip the MXU and use
    # D_in VPU outer-product FMAs (statically unrolled at trace time).
    zT = b1_ref[...] + w1[:, 0:1] * xT[0:1, :]          # (H,1)*(1,TN) -> (H,TN)
    for k in range(1, d_in):
        zT = zT + w1[:, k:k + 1] * xT[k:k + 1, :]

    # ReLU (full-relu default path: nb_relu_dim == -1 or == H)
    hT = jnp.maximum(zT, 0.0)

    # Layer 2: y^T = W2 @ h^T + b2  (MXU; output (D_out, TN) is lane-dense).
    yT = jnp.dot(w2_ref[...], hT, preferred_element_type=jnp.float32) + b2_ref[...]

    zT_ref[...] = zT.astype(zT_ref.dtype)
    hT_ref[...] = hT.astype(hT_ref.dtype)
    yT_ref[...] = yT.astype(yT_ref.dtype)
    # TODO(synk): partial-relu branch (0 < nb_relu_dim < H) of the PyTorch code
    # is itself buggy (torch.cat misuse); only the default full-relu path is
    # implemented here.


def _pick_tile(N):
    # Small N: one block covering everything (full-dim block is always legal).
    if N <= 256:
        return N
    # Otherwise aim for exactly 2 grid steps (uses both v7x TCs; neutral on
    # v5e/v6e), lane tile a multiple of 128, capped so very large N still uses
    # big (>=1024) tiles rather than many tiny ones.
    tn = -(-N // 2)                       # ceil(N / 2)
    tn = ((tn + 127) // 128) * 128        # lane-dim multiple of 128
    return min(tn, 8192)


def mlp_forward(x, w1, b1, w2, b2):
    """PyTorch nn.Linear layout:
         x:(N, D_in), w1:(H, D_in), b1:(H,), w2:(D_out, H), b2:(D_out,)
       Returns (y, h, z) with shapes (N, D_out), (N, H), (N, H)."""
    N, D_in = x.shape
    Hd = w1.shape[0]
    D_out = w2.shape[0]

    # Layout plumbing: batch goes to the lane (last) axis.
    xT = x.T                      # (D_in, N)
    b1c = b1.reshape(Hd, 1)       # column bias (broadcast across lanes)
    b2c = b2.reshape(D_out, 1)

    tn = _pick_tile(N)
    grid = (pl.cdiv(N, tn),)

    col = lambda rows: pl.BlockSpec((rows, tn), lambda i: (0, i))      # tiled on batch
    res = lambda shape: pl.BlockSpec(shape, lambda i: (0, 0))          # VMEM-resident

    cost = pl.CostEstimate(
        flops=2 * N * (D_in * Hd + Hd * D_out),
        transcendentals=0,
        bytes_accessed=4 * (N * D_in + Hd * D_in + Hd + D_out * Hd + D_out
                            + N * D_out + 2 * N * Hd),
    )

    yT, hT, zT = pl.pallas_call(
        mlp_kernel,
        grid=grid,
        in_specs=[
            col(D_in),            # x^T tile      (D_in, tn)
            res((Hd, D_in)),      # W1 resident   (H, D_in)
            res((Hd, 1)),         # b1 resident
            res((D_out, Hd)),     # W2 resident
            res((D_out, 1)),      # b2 resident
        ],
        out_specs=(
            col(D_out),           # y^T tile      (D_out, tn)  lane-dense
            col(Hd),              # h^T tile      (H, tn)      lane-dense
            col(Hd),              # z^T tile      (H, tn)      lane-dense
        ),
        out_shape=(
            jax.ShapeDtypeStruct((D_out, N), jnp.float32),
            jax.ShapeDtypeStruct((Hd, N), jnp.float32),
            jax.ShapeDtypeStruct((Hd, N), jnp.float32),
        ),
        compiler_params=pltpu.CompilerParams(
            dimension_semantics=("parallel",),
        ),
        cost_estimate=cost,
    )(xT, w1, b1c, w2, b2c)

    # Transpose back to the module's batch-major return contract.
    # (Callers that can consume the transposed layout may skip this.)
    return yT.T, hT.T, zT.T


if __name__ == "__main__":
    # Shapes consistent with the module: Model(D_in=2, H=32, D_out=8),
    # batch comparable to X = torch.randn(1000, 2), rounded to a clean lane size.
    N, D_in, Hd, D_out = 1024, 2, 32, 8

    key = jax.random.PRNGKey(0)
    kx, kw1, kb1, kw2, kb2 = jax.random.split(key, 5)

    x = jax.random.normal(kx, (N, D_in), dtype=jnp.float32)

    # PyTorch-like Linear init: W:(out,in), b:(out,), U(-1/sqrt(fan_in), 1/sqrt(fan_in))
    lim1 = 1.0 / (D_in ** 0.5)
    lim2 = 1.0 / (Hd ** 0.5)
    w1 = jax.random.uniform(kw1, (Hd, D_in), jnp.float32, -lim1, lim1)
    b1 = jax.random.uniform(kb1, (Hd,), jnp.float32, -lim1, lim1)
    w2 = jax.random.uniform(kw2, (D_out, Hd), jnp.float32, -lim2, lim2)
    b2 = jax.random.uniform(kb2, (D_out,), jnp.float32, -lim2, lim2)

    y, h, z = mlp_forward(x, w1, b1, w2, b2)
    jax.block_until_ready((y, h, z))

    # Pure-JAX reference (same math as the PyTorch module's default path)
    z_ref = x @ w1.T + b1
    h_ref = jnp.maximum(z_ref, 0.0)
    y_ref = h_ref @ w2.T + b2
    assert jnp.allclose(z, z_ref, atol=1e-5)
    assert jnp.allclose(h, h_ref, atol=1e-5)
    assert jnp.allclose(y, y_ref, atol=1e-5)

    print("KERNEL_OK")
</pallas_src>

<mosaic_0001>
module attributes {stable_mosaic.version = 11 : i64} {
  func.func @mlp_kernel(%arg0: i32, %arg1: memref<2x512xf32, #tpu.memory_space<vmem>>, %arg2: memref<32x2xf32, #tpu.memory_space<vmem>>, %arg3: memref<32x1xf32, #tpu.memory_space<vmem>>, %arg4: memref<8x32xf32, #tpu.memory_space<vmem>>, %arg5: memref<8x1xf32, #tpu.memory_space<vmem>>, %arg6: memref<8x512xf32, #tpu.memory_space<vmem>>, %arg7: memref<32x512xf32, #tpu.memory_space<vmem>>, %arg8: memref<32x512xf32, #tpu.memory_space<vmem>>) attributes {dimension_semantics = [#tpu.dimension_semantics<parallel>], iteration_bounds = array<i64: 2>, scalar_prefetch = 0 : i64, scratch_operands = 0 : i64, tpu.core_type = #tpu.core_type<tc>, window_params = [{transform_indices = @transform_0, window_bounds = array<i64: 2, 512>}, {pipeline_mode = #tpu.pipeline_mode<synchronous>, transform_indices = @transform_1, window_bounds = array<i64: 32, 2>}, {pipeline_mode = #tpu.pipeline_mode<synchronous>, transform_indices = @transform_2, window_bounds = array<i64: 32, 1>}, {pipeline_mode = #tpu.pipeline_mode<synchronous>, transform_indices = @transform_3, window_bounds = array<i64: 8, 32>}, {pipeline_mode = #tpu.pipeline_mode<synchronous>, transform_indices = @transform_4, window_bounds = array<i64: 8, 1>}, {transform_indices = @transform_5, window_bounds = array<i64: 8, 512>}, {transform_indices = @transform_6, window_bounds = array<i64: 32, 512>}, {transform_indices = @transform_7, window_bounds = array<i64: 32, 512>}]} {
    %c0 = arith.constant 0 : index
    %c0_0 = arith.constant 0 : index
    %0 = vector.load %arg1[%c0, %c0_0] : memref<2x512xf32, #tpu.memory_space<vmem>>, vector<2x512xf32>
    %c0_1 = arith.constant 0 : index
    %c0_2 = arith.constant 0 : index
    %1 = vector.load %arg2[%c0_1, %c0_2] : memref<32x2xf32, #tpu.memory_space<vmem>>, vector<32x2xf32>
    %c0_3 = arith.constant 0 : index
    %c0_4 = arith.constant 0 : index
    %2 = vector.load %arg3[%c0_3, %c0_4] : memref<32x1xf32, #tpu.memory_space<vmem>>, vector<32x1xf32>
    %3 = vector.extract_strided_slice %1 {offsets = [0, 0], sizes = [32, 1], strides = [1, 1]} : vector<32x2xf32> to vector<32x1xf32>
    %4 = vector.extract_strided_slice %0 {offsets = [0, 0], sizes = [1, 512], strides = [1, 1]} : vector<2x512xf32> to vector<1x512xf32>
    %5 = vector.broadcast %3 : vector<32x1xf32> to vector<32x512xf32>
    %6 = vector.broadcast %4 : vector<1x512xf32> to vector<32x512xf32>
    %7 = arith.mulf %5, %6 : vector<32x512xf32>
    %8 = vector.broadcast %2 : vector<32x1xf32> to vector<32x512xf32>
    %9 = arith.addf %8, %7 : vector<32x512xf32>
    %10 = vector.extract_strided_slice %1 {offsets = [0, 1], sizes = [32, 1], strides = [1, 1]} : vector<32x2xf32> to vector<32x1xf32>
    %11 = vector.extract_strided_slice %0 {offsets = [1, 0], sizes = [1, 512], strides = [1, 1]} : vector<2x512xf32> to vector<1x512xf32>
    %12 = vector.broadcast %10 : vector<32x1xf32> to vector<32x512xf32>
    %13 = vector.broadcast %11 : vector<1x512xf32> to vector<32x512xf32>
    %14 = arith.mulf %12, %13 : vector<32x512xf32>
    %15 = arith.addf %9, %14 : vector<32x512xf32>
    %cst = arith.constant 0.000000e+00 : f32
    %16 = vector.broadcast %cst : f32 to vector<32x512xf32>
    %17 = arith.maximumf %15, %16 : vector<32x512xf32>
    %c0_5 = arith.constant 0 : index
    %c0_6 = arith.constant 0 : index
    %18 = vector.load %arg4[%c0_5, %c0_6] : memref<8x32xf32, #tpu.memory_space<vmem>>, vector<8x32xf32>
    %cst_7 = arith.constant dense<0.000000e+00> : vector<8x512xf32>
    %19 = tpu.matmul %18, %17, %cst_7 {dimension_numbers = #tpu.dot_dimension_numbers<[1], [0], [0], [1], [0, 0, 1, 1], [], []>} : vector<8x32xf32>, vector<32x512xf32>, vector<8x512xf32> -> vector<8x512xf32>
    %c0_8 = arith.constant 0 : index
    %c0_9 = arith.constant 0 : index
    %20 = vector.load %arg5[%c0_8, %c0_9] : memref<8x1xf32, #tpu.memory_space<vmem>>, vector<8x1xf32>
    %21 = vector.broadcast %20 : vector<8x1xf32> to vector<8x512xf32>
    %22 = arith.addf %19, %21 : vector<8x512xf32>
    %c0_10 = arith.constant 0 : index
    %c0_11 = arith.constant 0 : index
    %23 = vector.load %arg8[%c0_10, %c0_11] : memref<32x512xf32, #tpu.memory_space<vmem>>, vector<32x512xf32>
    tpu.vector_store %arg8[%c0_10, %c0_11], %15 {strides = array<i32>} : memref<32x512xf32, #tpu.memory_space<vmem>>, vector<32x512xf32>,
    %c0_12 = arith.constant 0 : index
    %c0_13 = arith.constant 0 : index
    %24 = vector.load %arg7[%c0_12, %c0_13] : memref<32x512xf32, #tpu.memory_space<vmem>>, vector<32x512xf32>
    tpu.vector_store %arg7[%c0_12, %c0_13], %17 {strides = array<i32>} : memref<32x512xf32, #tpu.memory_space<vmem>>, vector<32x512xf32>,
    %c0_14 = arith.constant 0 : index
    %c0_15 = arith.constant 0 : index
    %25 = vector.load %arg6[%c0_14, %c0_15] : memref<8x512xf32, #tpu.memory_space<vmem>>, vector<8x512xf32>
    tpu.vector_store %arg6[%c0_14, %c0_15], %22 {strides = array<i32>} : memref<8x512xf32, #tpu.memory_space<vmem>>, vector<8x512xf32>,
    return
  }
  func.func @transform_0(%arg0: i32) -> (i32, i32) {
    %c0_i32 = arith.constant 0 : i32
    %c0_i32_0 = arith.constant 0 : i32
    return %c0_i32, %arg0 : i32, i32
  }
  func.func @transform_1(%arg0: i32) -> (i32, i32) {
    %c0_i32 = arith.constant 0 : i32
    %c0_i32_0 = arith.constant 0 : i32
    %c0_i32_1 = arith.constant 0 : i32
    return %c0_i32, %c0_i32_0 : i32, i32
  }
  func.func @transform_2(%arg0: i32) -> (i32, i32) {
    %c0_i32 = arith.constant 0 : i32
    %c0_i32_0 = arith.constant 0 : i32
    %c0_i32_1 = arith.constant 0 : i32
    return %c0_i32, %c0_i32_0 : i32, i32
  }
  func.func @transform_3(%arg0: i32) -> (i32, i32) {
    %c0_i32 = arith.constant 0 : i32
    %c0_i32_0 = arith.constant 0 : i32
    %c0_i32_1 = arith.constant 0 : i32
    return %c0_i32, %c0_i32_0 : i32, i32
  }
  func.func @transform_4(%arg0: i32) -> (i32, i32) {
    %c0_i32 = arith.constant 0 : i32
    %c0_i32_0 = arith.constant 0 : i32
    %c0_i32_1 = arith.constant 0 : i32
    return %c0_i32, %c0_i32_0 : i32, i32
  }
  func.func @transform_5(%arg0: i32) -> (i32, i32) {
    %c0_i32 = arith.constant 0 : i32
    %c0_i32_0 = arith.constant 0 : i32
    return %c0_i32, %arg0 : i32, i32
  }
  func.func @transform_6(%arg0: i32) -> (i32, i32) {
    %c0_i32 = arith.constant 0 : i32
    %c0_i32_0 = arith.constant 0 : i32
    return %c0_i32, %arg0 : i32, i32
  }
  func.func @transform_7(%arg0: i32) -> (i32, i32) {
    %c0_i32 = arith.constant 0 : i32
    %c0_i32_0 = arith.constant 0 : i32
    return %c0_i32, %arg0 : i32, i32
  }
}

</mosaic_0001>

<llo_original>
// kernel: tpu_custom_call.1
$region0: #{tpu_custom_call.1}
  #allocation0 [shape = 'u32[]', space=smem, size = 0x4, offset = 0x4, fixed_abs, tag = 'smem constant byte address 0x4 - core index']
  #allocation1 [shape = 'u32[144,128]{1,0:T(1,128)}', space=vmem, size = 0x12000, scoped, tag = 'internal scratch']
  %s0 = inlined_call_operand.vmem [shape: f32[2,1024], index: 0, kind: input, shape index: {}]
  %s1 = inlined_call_operand.vmem [shape: f32[32,2], index: 1, kind: input, shape index: {}]
  %s2 = inlined_call_operand.vmem [shape: f32[32,1], index: 2, kind: input, shape index: {}]
  %s3 = inlined_call_operand.vmem [shape: f32[8,32], index: 3, kind: input, shape index: {}]
  %s4 = inlined_call_operand.vmem [shape: f32[8,1], index: 4, kind: input, shape index: {}]
  %s5 = inlined_call_operand.hbm [shape: f32[8,1024], index: 5, kind: output, shape index: {0}]
  %s6 = inlined_call_operand.hbm [shape: f32[32,1024], index: 6, kind: output, shape index: {1}]
  %s7 = inlined_call_operand.hbm [shape: f32[32,1024], index: 7, kind: output, shape index: {2}]
  %8 = xla_tuple %s5, %s6, %s7
  %s9 = sld [smem:[#allocation0]]
  $region69: #{tpu_custom_call.1} parent=0
    _
  %s11 = ssub.s32 1, %s9
  %s12 = scalar_select 0, %s11, %s9
  $region1: #{tpu_custom_call.1} parent=0
    #allocation2 [shape = 'u8[32768]{0}', space=vmem, size = 0x8000, scoped, tag = 'output window, operand 0']
    #allocation3 [shape = 's32[2]{0}', space=sflag, size = 0x8, scoped, tag = 'scoped memory for tpu_custom_call.1']
    #allocation4 [shape = 'u8[131072]{0}', space=vmem, size = 0x20000, scoped, tag = 'output window, operand 1']
    #allocation5 [shape = 's32[2]{0}', space=sflag, size = 0x8, scoped, tag = 'scoped memory for tpu_custom_call.1']
    #allocation6 [shape = 'u8[131072]{0}', space=vmem, size = 0x20000, scoped, tag = 'output window, operand 2']
    %13 = vsyncpa [#allocation3], 0
    %s14 = scalar_lea.sflag [#allocation3], 1
    %15 = vsyncpa %s14, 0
    %16 = vsyncpa [#allocation5], 0
    %s17 = scalar_lea.sflag [#allocation5], 1
    %18 = vsyncpa %s17, 0
    loop: start=0, step=1, limit=4
    $region2: #{tpu_custom_call.1} parent=1 // loop_pre_header
      _
    $region3: #{tpu_custom_call.1} parent=1 // loop_header
      %s20 = sphi 0, %s24
      %p21 = scmp.ge.s32.totalorder %s20, 4
      %s30 = sphi 0, %s32
      %s33 = sphi 0, %s30
      %s34 = sphi 0, %s33
      %s50 = sphi 0, %s34
      %s54 = sphi 0, %s54
      %s56 = sphi 0, %s54
      %s57 = sphi 0, %s56
      %s71 = sphi 0, %s57
      %s75 = sphi 0, %s75
      %s77 = sphi 0, %s75
      %s78 = sphi 0, %s77
      %s92 = sphi 0, %s78
      %s96 = sphi 0, %s96
      %s98 = sphi 0, %s96
      %s99 = sphi 0, %s98
      %s113 = sphi 0, %s99
      %s117 = sphi 0, %s117
      %s119 = sphi 0, %s117
      %s120 = sphi 0, %s119
      %s134 = sphi 0, %s120
      %s140 = sphi 0, %s142
      %s143 = sphi 0, %s140
      %s144 = sphi 0, %s143
      %s160 = sphi 0, %s144
      %s166 = sphi 0, %s168
      %s169 = sphi 0, %s166
      %s170 = sphi 0, %s169
      %s186 = sphi 0, %s170
      %s192 = sphi 0, %s194
      %s195 = sphi 0, %s192
      %s196 = sphi 0, %s195
      %s212 = sphi 0, %s196
    $region4: #{tpu_custom_call.1} parent=1 // loop_header_branch
      %23 = sbr.rel (%p21) target = $region8
    $region5: #{tpu_custom_call.1} parent=1 // loop_body
      %s25 = ssub.s32 %s20, 1
      %s26 = ssub.s32 %s20, 2
      %s27 = sadd.s32 %s20, 1
      %s28 = ssub.s32 %s20, %s27
      %p29 = scmp.eq.s32.totalorder %s28, 0
      %s31 = sadd.s32 %s30, 1
      %s32 = scalar_select %p29, %s30, %s31
      %p35 = pneg %p29
      %p36 = scmp.eq.s32.totalorder %s20, 1
      %p37 = por %p35, %p36
      %p38 = scmp.ne.s32.totalorder %s30, %s33
      %p39 = scmp.eq.s32.totalorder %s20, 0
      %p40 = por %p38, %p39
      %p41 = scmp.ne.s32.totalorder %s30, %s33
      %p42 = scmp.eq.s32.totalorder %s25, 1
      %p43 = por %p41, %p42
      %p44 = scmp.ne.s32.totalorder %s33, %s34
      %p45 = scmp.eq.s32.totalorder %s25, 0
      %p46 = por %p44, %p45
      %p47 = scmp.ne.s32.totalorder %s33, %s34
      %p48 = scmp.eq.s32.totalorder %s26, 1
      %p49 = por %p47, %p48
      %p51 = scmp.ne.s32.totalorder %s34, %s50
      %p52 = scmp.eq.s32.totalorder %s26, 0
      %p53 = por %p51, %p52
      %s55 = sadd.s32 %s54, 1
      %p58 = scmp.eq.s32.totalorder %s20, 1
      %p59 = scmp.ne.s32.totalorder %s54, %s56
      %p60 = scmp.eq.s32.totalorder %s20, 0
      %p61 = por %p59, %p60
      %p62 = scmp.ne.s32.totalorder %s54, %s56
      %p63 = scmp.eq.s32.totalorder %s25, 1
      %p64 = por %p62, %p63
      %p65 = scmp.ne.s32.totalorder %s56, %s57
      %p66 = scmp.eq.s32.totalorder %s25, 0
      %p67 = por %p65, %p66
      %p68 = scmp.ne.s32.totalorder %s56, %s57
      %p69 = scmp.eq.s32.totalorder %s26, 1
      %p70 = por %p68, %p69
      %p72 = scmp.ne.s32.totalorder %s57, %s71
      %p73 = scmp.eq.s32.totalorder %s26, 0
      %p74 = por %p72, %p73
      %s76 = sadd.s32 %s75, 1
      %p79 = scmp.eq.s32.totalorder %s20, 1
      %p80 = scmp.ne.s32.totalorder %s75, %s77
      %p81 = scmp.eq.s32.totalorder %s20, 0
      %p82 = por %p80, %p81
      %p83 = scmp.ne.s32.totalorder %s75, %s77
      %p84 = scmp.eq.s32.totalorder %s25, 1
      %p85 = por %p83, %p84
      %p86 = scmp.ne.s32.totalorder %s77, %s78
      %p87 = scmp.eq.s32.totalorder %s25, 0
      %p88 = por %p86, %p87
      %p89 = scmp.ne.s32.totalorder %s77, %s78
      %p90 = scmp.eq.s32.totalorder %s26, 1
      %p91 = por %p89, %p90
      %p93 = scmp.ne.s32.totalorder %s78, %s92
      %p94 = scmp.eq.s32.totalorder %s26, 0
      %p95 = por %p93, %p94
      %s97 = sadd.s32 %s96, 1
      %p100 = scmp.eq.s32.totalorder %s20, 1
      %p101 = scmp.ne.s32.totalorder %s96, %s98
      %p102 = scmp.eq.s32.totalorder %s20, 0
      %p103 = por %p101, %p102
      %p104 = scmp.ne.s32.totalorder %s96, %s98
      %p105 = scmp.eq.s32.totalorder %s25, 1
      %p106 = por %p104, %p105
      %p107 = scmp.ne.s32.totalorder %s98, %s99
      %p108 = scmp.eq.s32.totalorder %s25, 0
      %p109 = por %p107, %p108
      %p110 = scmp.ne.s32.totalorder %s98, %s99
      %p111 = scmp.eq.s32.totalorder %s26, 1
      %p112 = por %p110, %p111
      %p114 = scmp.ne.s32.totalorder %s99, %s113
      %p115 = scmp.eq.s32.totalorder %s26, 0
      %p116 = por %p114, %p115
      %s118 = sadd.s32 %s117, 1
      %p121 = scmp.eq.s32.totalorder %s20, 1
      %p122 = scmp.ne.s32.totalorder %s117, %s119
      %p123 = scmp.eq.s32.totalorder %s20, 0
      %p124 = por %p122, %p123
      %p125 = scmp.ne.s32.totalorder %s117, %s119
      %p126 = scmp.eq.s32.totalorder %s25, 1
      %p127 = por %p125, %p126
      %p128 = scmp.ne.s32.totalorder %s119, %s120
      %p129 = scmp.eq.s32.totalorder %s25, 0
      %p130 = por %p128, %p129
      %p131 = scmp.ne.s32.totalorder %s119, %s120
      %p132 = scmp.eq.s32.totalorder %s26, 1
      %p133 = por %p131, %p132
      %p135 = scmp.ne.s32.totalorder %s120, %s134
      %p136 = scmp.eq.s32.totalorder %s26, 0
      %p137 = por %p135, %p136
      %s138 = ssub.s32 %s20, %s27
      %p139 = scmp.eq.s32.totalorder %s138, 0
      %s141 = sadd.s32 %s140, 1
      %s142 = scalar_select %p139, %s140, %s141
      %p145 = pneg %p139
      %p146 = scmp.eq.s32.totalorder %s20, 1
      %p147 = por %p145, %p146
      %p148 = scmp.ne.s32.totalorder %s140, %s143
      %p149 = scmp.eq.s32.totalorder %s20, 0
      %p150 = por %p148, %p149
      %p151 = scmp.ne.s32.totalorder %s140, %s143
      %p152 = scmp.eq.s32.totalorder %s25, 1
      %p153 = por %p151, %p152
      %p154 = scmp.ne.s32.totalorder %s143, %s144
      %p155 = scmp.eq.s32.totalorder %s25, 0
      %p156 = por %p154, %p155
      %p157 = scmp.ne.s32.totalorder %s143, %s144
      %p158 = scmp.eq.s32.totalorder %s26, 1
      %p159 = por %p157, %p158
      %p161 = scmp.ne.s32.totalorder %s144, %s160
      %p162 = scmp.eq.s32.totalorder %s26, 0
      %p163 = por %p161, %p162
      %s164 = ssub.s32 %s20, %s27
      %p165 = scmp.eq.s32.totalorder %s164, 0
      %s167 = sadd.s32 %s166, 1
      %s168 = scalar_select %p165, %s166, %s167
      %p171 = pneg %p165
      %p172 = scmp.eq.s32.totalorder %s20, 1
      %p173 = por %p171, %p172
      %p174 = scmp.ne.s32.totalorder %s166, %s169
      %p175 = scmp.eq.s32.totalorder %s20, 0
      %p176 = por %p174, %p175
      %p177 = scmp.ne.s32.totalorder %s166, %s169
      %p178 = scmp.eq.s32.totalorder %s25, 1
      %p179 = por %p177, %p178
      %p180 = scmp.ne.s32.totalorder %s169, %s170
      %p181 = scmp.eq.s32.totalorder %s25, 0
      %p182 = por %p180, %p181
      %p183 = scmp.ne.s32.totalorder %s169, %s170
      %p184 = scmp.eq.s32.totalorder %s26, 1
      %p185 = por %p183, %p184
      %p187 = scmp.ne.s32.totalorder %s170, %s186
      %p188 = scmp.eq.s32.totalorder %s26, 0
      %p189 = por %p187, %p188
      %s190 = ssub.s32 %s20, %s27
      %p191 = scmp.eq.s32.totalorder %s190, 0
      %s193 = sadd.s32 %s192, 1
      %s194 = scalar_select %p191, %s192, %s193
      %p197 = pneg %p191
      %p198 = scmp.eq.s32.totalorder %s20, 1
      %p199 = por %p197, %p198
      %p200 = scmp.ne.s32.totalorder %s192, %s195
      %p201 = scmp.eq.s32.totalorder %s20, 0
      %p202 = por %p200, %p201
      %p203 = scmp.ne.s32.totalorder %s192, %s195
      %p204 = scmp.eq.s32.totalorder %s25, 1
      %p205 = por %p203, %p204
      %p206 = scmp.ne.s32.totalorder %s195, %s196
      %p207 = scmp.eq.s32.totalorder %s25, 0
      %p208 = por %p206, %p207
      %p209 = scmp.ne.s32.totalorder %s195, %s196
      %p210 = scmp.eq.s32.totalorder %s26, 1
      %p211 = por %p209, %p210
      %p213 = scmp.ne.s32.totalorder %s196, %s212
      %p214 = scmp.eq.s32.totalorder %s26, 0
      %p215 = por %p213, %p214
      %p216 = scmp.le.s32.totalorder 1, %s20
      %p217 = scmp.lt.s32.totalorder %s20, 3
      %p218 = pnand %p216, %p217
      %p219 = pneg %p218
      // Predicated region
      $region9: #{tpu_custom_call.1} parent=5 // pred_check
        _
      $region10: #{tpu_custom_call.1} parent=5 // pred_check_branch
        %221 = sbr.rel (%p218) target = $region12
      $region11: #{tpu_custom_call.1} parent=5 // pred_region
        %s222 = ssub.s32 %s20, 1
        // Predicated region
        $region13: #{tpu_custom_call.1} parent=11 // pred_check
          %p223 = pneg %p67
        $region14: #{tpu_custom_call.1} parent=11 // pred_check_branch
          %225 = sbr.rel (%p223) target = $region16
        $region15: #{tpu_custom_call.1} parent=11 // pred_region
          _
        $region16: #{tpu_custom_call.1} parent=11 // pred_fallthru
          _
        // Predicated region
        $region17: #{tpu_custom_call.1} parent=11 // pred_check
          %p226 = pneg %p88
        $region18: #{tpu_custom_call.1} parent=11 // pred_check_branch
          %228 = sbr.rel (%p226) target = $region20
        $region19: #{tpu_custom_call.1} parent=11 // pred_region
          _
        $region20: #{tpu_custom_call.1} parent=11 // pred_fallthru
          _
        // Predicated region
        $region21: #{tpu_custom_call.1} parent=11 // pred_check
          %p229 = pneg %p109
        $region22: #{tpu_custom_call.1} parent=11 // pred_check_branch
          %231 = sbr.rel (%p229) target = $region24
        $region23: #{tpu_custom_call.1} parent=11 // pred_region
          _
        $region24: #{tpu_custom_call.1} parent=11 // pred_fallthru
          _
        // Predicated region
        $region25: #{tpu_custom_call.1} parent=11 // pred_check
          %p232 = pneg %p130
        $region26: #{tpu_custom_call.1} parent=11 // pred_check_branch
          %234 = sbr.rel (%p232) target = $region28
        $region27: #{tpu_custom_call.1} parent=11 // pred_region
          _
        $region28: #{tpu_custom_call.1} parent=11 // pred_fallthru
          _
      $region12: #{tpu_custom_call.1} parent=5 // pred_fallthru
        _
      %p235 = scmp.lt.s32.totalorder %s20, 2
      // Predicated region
      $region29: #{tpu_custom_call.1} parent=5 // pred_check
        %p236 = pneg %p235
      $region30: #{tpu_custom_call.1} parent=5 // pred_check_branch
        %238 = sbr.rel (%p236) target = $region32
      $region31: #{tpu_custom_call.1} parent=5 // pred_region
        // Predicated region
        $region33: #{tpu_custom_call.1} parent=31 // pred_check
          %p239 = pneg %p40
        $region34: #{tpu_custom_call.1} parent=31 // pred_check_branch
          %241 = sbr.rel (%p239) target = $region36
        $region35: #{tpu_custom_call.1} parent=31 // pred_region
          %s242 = smul.u32 4, %s20
          %p243 = scmp.lt.s32.totalorder %s242, 7
          %s244 = scalar_select %p243, %s242, 7
          %s245 = smul.addr %s244, 2
          %s246 = scalar_lea.vmem %s0, %s245
          %s247 = smul.u32 4, %s20
        $region36: #{tpu_custom_call.1} parent=31 // pred_fallthru
          _
      $region32: #{tpu_custom_call.1} parent=5 // pred_fallthru
        _
      %p248 = scmp.le.s32.totalorder 1, %s20
      %p249 = scmp.lt.s32.totalorder %s20, 3
      %p250 = pnand %p248, %p249
      %p251 = pneg %p250
      // Predicated region
      $region37: #{tpu_custom_call.1} parent=5 // pred_check
        _
      $region38: #{tpu_custom_call.1} parent=5 // pred_check_branch
        %253 = sbr.rel (%p250) target = $region40
      $region39: #{tpu_custom_call.1} parent=5 // pred_region
        %s254 = ssub.s32 %s20, 1
        %s255 = smul.u32 4, %s25
        %p256 = scmp.lt.s32.totalorder %s255, 7
        %s257 = scalar_select %p256, %s255, 7
        %s258 = smul.addr %s257, 2
        %s259 = scalar_lea.vmem %s0, %s258
        %p260 = pneg %p46
        %p261 = pneg %p43
        %p262 = pneg %p67
        %p263 = pneg %p64
        %p264 = pneg %p88
        %p265 = pneg %p85
        %p266 = pneg %p109
        %p267 = pneg %p106
        %p268 = pneg %p130
        %p269 = pneg %p127
        %p270 = pneg %p156
        %p271 = pneg %p153
        %s272 = sand.u32 %s143, 1
        %s273 = scalar_lea.sflag [#allocation3], %s272
        %s274 = sand.u32 %s143, 1
        %s275 = smul.addr %s274, 32
        %s276 = scalar_lea.vmem [#allocation2], %s275
        %p277 = pneg %p182
        %p278 = pneg %p179
        %s279 = sand.u32 %s25, 1
        %s280 = scalar_lea.sflag [#allocation5], %s279
        %s281 = sand.u32 %s169, 1
        %s282 = smul.addr %s281, 128
        %s283 = scalar_lea.vmem [#allocation4], %s282
        %p284 = pneg %p208
        %p285 = pneg %p205
        %s286 = sand.u32 %s25, 1
        %s287 = scalar_lea.sflag [#allocation5], %s286
        %s288 = sand.u32 %s195, 1
        %s289 = smul.addr %s288, 128
        %s290 = scalar_lea.vmem [#allocation6], %s289
        %s291 = smul.u32 4, %s25
        %p292 = scmp.lt.s32.totalorder %s291, 7
        %s293 = scalar_select %p292, %s291, 7
        %s294 = smul.addr %s293, 2
        %s295 = scalar_lea.vmem %s0, %s294
        %s296 = smul.u32 4, %s25
        %s297 = smul.u32 4, %s25
        %s298 = smul.u32 4, %s25
        %s299 = smul.u32 4, %s25
        %v300 = vld [vmem:[%s295] sm:$0xff]
        %v301 = vld [vmem:[%s1] sm:$0xff]
        %v302 = vld [vmem:[%s1 + $0x8] sm:$0xff]
        %v303 = vld [vmem:[%s1 + $0x10] sm:$0xff]
        %v304 = vld [vmem:[%s1 + $0x18] sm:$0xff]
        %v305 = vld [vmem:[%s2] sm:$0xff]
        %v306 = vld [vmem:[%s2 + $0x8] sm:$0xff]
        %v307 = vld [vmem:[%s2 + $0x10] sm:$0xff]
        %v308 = vld [vmem:[%s2 + $0x18] sm:$0xff]
        %310 = vset.pattern.permute.xlu0 0
        %311 = vperm.xlu0 %310, %v301
        %v312 = vpop.permute.xlu0 %311
        %315 = vset.pattern.permute.xlu0 0
        %316 = vperm.xlu0 %315, %v302
        %v317 = vpop.permute.xlu0 %316
        %320 = vset.pattern.permute.xlu0 0
        %321 = vperm.xlu0 %320, %v303
        %v322 = vpop.permute.xlu0 %321
        %325 = vset.pattern.permute.xlu0 0
        %326 = vperm.xlu0 %325, %v304
        %v327 = vpop.permute.xlu0 %326
        %v330 = vlaneseq
        %v331 = vshrl.u32 %v330, 7
        %v332 = vsub.s32 0, %v331
        %v333 = vrot.slane %v300, %v332
        %v334 = vlaneseq
        %v335 = vshrl.u32 %v334, 7
        %v336 = vsub.s32 2, %v335
        %v337 = vrot.slane %v300, %v336
        %v338 = vlaneseq
        %v339 = vshrl.u32 %v338, 7
        %v340 = vsub.s32 4, %v339
        %v341 = vrot.slane %v300, %v340
        %v342 = vlaneseq
        %v343 = vshrl.u32 %v342, 7
        %v344 = vsub.s32 6, %v343
        %v345 = vrot.slane %v300, %v344
        %v350 = vlaneseq
        %v351 = vshrl.u32 %v350, 7
        %v352 = vsub.s32 0, %v351
        %v353 = vrot.slane %v333, %v352
        %v354 = vlaneseq
        %v355 = vshrl.u32 %v354, 7
        %v356 = vsub.s32 0, %v355
        %v357 = vrot.slane %v337, %v356
        %v358 = vlaneseq
        %v359 = vshrl.u32 %v358, 7
        %v360 = vsub.s32 0, %v359
        %v361 = vrot.slane %v341, %v360
        %v362 = vlaneseq
        %v363 = vshrl.u32 %v362, 7
        %v364 = vsub.s32 0, %v363
        %v365 = vrot.slane %v345, %v364
        %v366 = vmul.f32 %v312, %v353
        %v367 = vmul.f32 %v312, %v357
        %v368 = vmul.f32 %v312, %v361
        %v369 = vmul.f32 %v312, %v365
        %v370 = vmul.f32 %v317, %v353
        %v371 = vmul.f32 %v317, %v357
        %v372 = vmul.f32 %v317, %v361
        %v373 = vmul.f32 %v317, %v365
        %v374 = vmul.f32 %v322, %v353
        %v375 = vmul.f32 %v322, %v357
        %v376 = vmul.f32 %v322, %v361
        %v377 = vmul.f32 %v322, %v365
        %v378 = vmul.f32 %v327, %v353
        %v379 = vmul.f32 %v327, %v357
        %v380 = vmul.f32 %v327, %v361
        %v381 = vmul.f32 %v327, %v365
        %383 = vset.pattern.permute.xlu0 0
        %384 = vperm.xlu0 %383, %v305
        %v385 = vpop.permute.xlu0 %384
        %388 = vset.pattern.permute.xlu0 0
        %389 = vperm.xlu0 %388, %v306
        %v390 = vpop.permute.xlu0 %389
        %393 = vset.pattern.permute.xlu0 0
        %394 = vperm.xlu0 %393, %v307
        %v395 = vpop.permute.xlu0 %394
        %398 = vset.pattern.permute.xlu0 0
        %399 = vperm.xlu0 %398, %v308
        %v400 = vpop.permute.xlu0 %399
        %v402 = vadd.f32 %v385, %v366
        %v403 = vadd.f32 %v385, %v367
        %v404 = vadd.f32 %v385, %v368
        %v405 = vadd.f32 %v385, %v369
        %v406 = vadd.f32 %v390, %v370
        %v407 = vadd.f32 %v390, %v371
        %v408 = vadd.f32 %v390, %v372
        %v409 = vadd.f32 %v390, %v373
        %v410 = vadd.f32 %v395, %v374
        %v411 = vadd.f32 %v395, %v375
        %v412 = vadd.f32 %v395, %v376
        %v413 = vadd.f32 %v395, %v377
        %v414 = vadd.f32 %v400, %v378
        %v415 = vadd.f32 %v400, %v379
        %v416 = vadd.f32 %v400, %v380
        %v417 = vadd.f32 %v400, %v381
        %418 = vset.pattern.permute.xlu0 1
        %419 = vperm.xlu0 %418, %v301
        %v420 = vpop.permute.xlu0 %419
        %422 = vset.pattern.permute.xlu0 1
        %423 = vperm.xlu0 %422, %v302
        %v424 = vpop.permute.xlu0 %423
        %426 = vset.pattern.permute.xlu0 1
        %427 = vperm.xlu0 %426, %v303
        %v428 = vpop.permute.xlu0 %427
        %430 = vset.pattern.permute.xlu0 1
        %431 = vperm.xlu0 %430, %v304
        %v432 = vpop.permute.xlu0 %431
        %v434 = vlaneseq
        %v435 = vshrl.u32 %v434, 7
        %v436 = vsub.s32 1, %v435
        %v437 = vrot.slane %v300, %v436
        %v438 = vlaneseq
        %v439 = vshrl.u32 %v438, 7
        %v440 = vsub.s32 3, %v439
        %v441 = vrot.slane %v300, %v440
        %v442 = vlaneseq
        %v443 = vshrl.u32 %v442, 7
        %v444 = vsub.s32 5, %v443
        %v445 = vrot.slane %v300, %v444
        %v446 = vlaneseq
        %v447 = vshrl.u32 %v446, 7
        %v448 = vsub.s32 7, %v447
        %v449 = vrot.slane %v300, %v448
        %v454 = vlaneseq
        %v455 = vshrl.u32 %v454, 7
        %v456 = vsub.s32 1, %v455
        %v457 = vrot.slane %v437, %v456
        %v458 = vlaneseq
        %v459 = vshrl.u32 %v458, 7
        %v460 = vsub.s32 1, %v459
        %v461 = vrot.slane %v441, %v460
        %v462 = vlaneseq
        %v463 = vshrl.u32 %v462, 7
        %v464 = vsub.s32 1, %v463
        %v465 = vrot.slane %v445, %v464
        %v466 = vlaneseq
        %v467 = vshrl.u32 %v466, 7
        %v468 = vsub.s32 1, %v467
        %v469 = vrot.slane %v449, %v468
        %v470 = vmul.f32 %v420, %v457
        %v471 = vmul.f32 %v420, %v461
        %v472 = vmul.f32 %v420, %v465
        %v473 = vmul.f32 %v420, %v469
        %v474 = vmul.f32 %v424, %v457
        %v475 = vmul.f32 %v424, %v461
        %v476 = vmul.f32 %v424, %v465
        %v477 = vmul.f32 %v424, %v469
        %v478 = vmul.f32 %v428, %v457
        %v479 = vmul.f32 %v428, %v461
        %v480 = vmul.f32 %v428, %v465
        %v481 = vmul.f32 %v428, %v469
        %v482 = vmul.f32 %v432, %v457
        %v483 = vmul.f32 %v432, %v461
        %v484 = vmul.f32 %v432, %v465
        %v485 = vmul.f32 %v432, %v469
        %v486 = vadd.f32 %v402, %v470
        %v487 = vadd.f32 %v403, %v471
        %v488 = vadd.f32 %v404, %v472
        %v489 = vadd.f32 %v405, %v473
        %v490 = vadd.f32 %v406, %v474
        %v491 = vadd.f32 %v407, %v475
        %v492 = vadd.f32 %v408, %v476
        %v493 = vadd.f32 %v409, %v477
        %v494 = vadd.f32 %v410, %v478
        %v495 = vadd.f32 %v411, %v479
        %v496 = vadd.f32 %v412, %v480
        %v497 = vadd.f32 %v413, %v481
        %v498 = vadd.f32 %v414, %v482
        %v499 = vadd.f32 %v415, %v483
        %v500 = vadd.f32 %v416, %v484
        %v501 = vadd.f32 %v417, %v485
        %v502 = vmax.f32 %v486, 0.0
        %v503 = vmax.f32 %v487, 0.0
        %v504 = vmax.f32 %v488, 0.0
        %v505 = vmax.f32 %v489, 0.0
        %v506 = vmax.f32 %v490, 0.0
        %v507 = vmax.f32 %v491, 0.0
        %v508 = vmax.f32 %v492, 0.0
        %v509 = vmax.f32 %v493, 0.0
        %v510 = vmax.f32 %v494, 0.0
        %v511 = vmax.f32 %v495, 0.0
        %v512 = vmax.f32 %v496, 0.0
        %v513 = vmax.f32 %v497, 0.0
        %v514 = vmax.f32 %v498, 0.0
        %v515 = vmax.f32 %v499, 0.0
        %v516 = vmax.f32 %v500, 0.0
        %v517 = vmax.f32 %v501, 0.0
        %v518 = vld [vmem:[%s3] sm:$0xff]
        %v519 = vld [vmem:[%s4] sm:$0xff]
        %521 = vset.pattern.permute.xlu0 0
        %522 = vperm.xlu0 %521, %v519
        %v523 = vpop.permute.xlu0 %522
        %vm525 = vcmask 261120
        %v527 = vsel %vm525, %v518, 0
        %529 = vmatprep.subr.mxu0 %v503
        %530 = vmatpush1.msra.mxu0 %v502
        %531 = vmatprep.subr.mxu0 %v507
        %532 = vmatpush1.msra.mxu0 %v506
        %533 = vmatprep.subr.mxu0 %v511
        %534 = vmatpush1.msra.mxu0 %v510
        %535 = vmatprep.subr.mxu0 %v515
        %536 = vmatpush1.msra.mxu0 %v514
        %537 = vmatprep.subr.mxu0 0.0
        %538 = vmatpush1.msra.mxu0 0.0
        %539 = vmatprep.subr.mxu0 0.0
        %540 = vmatpush1.msra.mxu0 0.0
        %541 = vmatprep.subr.mxu0 0.0
        %542 = vmatpush1.msra.mxu0 0.0
        %543 = vmatprep.subr.mxu0 0.0
        %544 = vmatpush1.msra.mxu0 0.0
        %545 = vmatprep.subr.mxu0 0.0
        %546 = vmatpush1.msra.mxu0 0.0
        %547 = vmatprep.subr.mxu0 0.0
        %548 = vmatpush1.msra.mxu0 0.0
        %549 = vmatprep.subr.mxu0 0.0
        %550 = vmatpush1.msra.mxu0 0.0
        %551 = vmatprep.subr.mxu0 0.0
        %552 = vmatpush1.msra.mxu0 0.0
        %553 = vmatprep.subr.mxu0 0.0
        %554 = vmatpush1.msra.mxu0 0.0
        %555 = vmatprep.subr.mxu0 0.0
        %556 = vmatpush1.msra.mxu0 0.0
        %557 = vmatprep.subr.mxu0 0.0
        %558 = vmatpush1.msra.mxu0 0.0
        %559 = vmatprep.subr.mxu0 0.0
        %560 = vmatpush1.msra.mxu0 0.0
        %561 = vmatprep.subr.mxu0 0.0
        %562 = vmatpush1.msra.mxu0 0.0
        %563 = vmatprep.subr.mxu0 0.0
        %564 = vmatpush1.msra.mxu0 0.0
        %565 = vmatprep.subr.mxu0 0.0
        %566 = vmatpush1.msra.mxu0 0.0
        %567 = vmatprep.subr.mxu0 0.0
        %568 = vmatpush1.msra.mxu0 0.0
        %569 = vmatprep.subr.mxu0 0.0
        %570 = vmatpush1.msra.mxu0 0.0
        %571 = vmatprep.subr.mxu0 0.0
        %572 = vmatpush1.msra.mxu0 0.0
        %573 = vmatprep.subr.mxu0 0.0
        %574 = vmatpush1.msra.mxu0 0.0
        %575 = vmatprep.subr.mxu0 0.0
        %576 = vmatpush1.msra.mxu0 0.0
        %577 = vmatprep.subr.mxu0 0.0
        %578 = vmatpush1.msra.mxu0 0.0
        %579 = vmatprep.subr.mxu0 0.0
        %580 = vmatpush1.msra.mxu0 0.0
        %581 = vmatprep.subr.mxu0 0.0
        %582 = vmatpush1.msra.mxu0 0.0
        %583 = vmatprep.subr.mxu0 0.0
        %584 = vmatpush1.msra.mxu0 0.0
        %585 = vmatprep.subr.mxu0 0.0
        %586 = vmatpush1.msra.mxu0 0.0
        %587 = vmatprep.subr.mxu0 0.0
        %588 = vmatpush1.msra.mxu0 0.0
        %589 = vmatprep.subr.mxu0 0.0
        %590 = vmatpush1.msra.mxu0 0.0
        %591 = vmatprep.subr.mxu0 0.0
        %592 = vmatpush1.msra.mxu0 0.0
        %593 = vmatprep.mubr.f32.mxu0 0.0
        %594 = vmatmul.mubr.f32.gmra.mrb[0].mxu0 %v527
        %v595 = vpop.f32.mrb[0].mxu0
        %v596 = vadd.f32 %v523, %v595
        %v597 = vpop.f32.mrb[0].mxu0
        %v598 = vadd.f32 %v523, %v597
        %599 = vdwg.mxu0
        %600 = vmatprep.subr.mxu0 %v505
        %601 = vmatpush1.msra.mxu0 %v504
        %602 = vmatprep.subr.mxu0 %v509
        %603 = vmatpush1.msra.mxu0 %v508
        %604 = vmatprep.subr.mxu0 %v513
        %605 = vmatpush1.msra.mxu0 %v512
        %606 = vmatprep.subr.mxu0 %v517
        %607 = vmatpush1.msra.mxu0 %v516
        %608 = vmatprep.subr.mxu0 0.0
        %609 = vmatpush1.msra.mxu0 0.0
        %610 = vmatprep.subr.mxu0 0.0
        %611 = vmatpush1.msra.mxu0 0.0
        %612 = vmatprep.subr.mxu0 0.0
        %613 = vmatpush1.msra.mxu0 0.0
        %614 = vmatprep.subr.mxu0 0.0
        %615 = vmatpush1.msra.mxu0 0.0
        %616 = vmatprep.subr.mxu0 0.0
        %617 = vmatpush1.msra.mxu0 0.0
        %618 = vmatprep.subr.mxu0 0.0
        %619 = vmatpush1.msra.mxu0 0.0
        %620 = vmatprep.subr.mxu0 0.0
        %621 = vmatpush1.msra.mxu0 0.0
        %622 = vmatprep.subr.mxu0 0.0
        %623 = vmatpush1.msra.mxu0 0.0
        %624 = vmatprep.subr.mxu0 0.0
        %625 = vmatpush1.msra.mxu0 0.0
        %626 = vmatprep.subr.mxu0 0.0
        %627 = vmatpush1.msra.mxu0 0.0
        %628 = vmatprep.subr.mxu0 0.0
        %629 = vmatpush1.msra.mxu0 0.0
        %630 = vmatprep.subr.mxu0 0.0
        %631 = vmatpush1.msra.mxu0 0.0
        %632 = vmatprep.subr.mxu0 0.0
        %633 = vmatpush1.msra.mxu0 0.0
        %634 = vmatprep.subr.mxu0 0.0
        %635 = vmatpush1.msra.mxu0 0.0
        %636 = vmatprep.subr.mxu0 0.0
        %637 = vmatpush1.msra.mxu0 0.0
        %638 = vmatprep.subr.mxu0 0.0
        %639 = vmatpush1.msra.mxu0 0.0
        %640 = vmatprep.subr.mxu0 0.0
        %641 = vmatpush1.msra.mxu0 0.0
        %642 = vmatprep.subr.mxu0 0.0
        %643 = vmatpush1.msra.mxu0 0.0
        %644 = vmatprep.subr.mxu0 0.0
        %645 = vmatpush1.msra.mxu0 0.0
        %646 = vmatprep.subr.mxu0 0.0
        %647 = vmatpush1.msra.mxu0 0.0
        %648 = vmatprep.subr.mxu0 0.0
        %649 = vmatpush1.msra.mxu0 0.0
        %650 = vmatprep.subr.mxu0 0.0
        %651 = vmatpush1.msra.mxu0 0.0
        %652 = vmatprep.subr.mxu0 0.0
        %653 = vmatpush1.msra.mxu0 0.0
        %654 = vmatprep.subr.mxu0 0.0
        %655 = vmatpush1.msra.mxu0 0.0
        %656 = vmatprep.subr.mxu0 0.0
        %657 = vmatpush1.msra.mxu0 0.0
        %658 = vmatprep.subr.mxu0 0.0
        %659 = vmatpush1.msra.mxu0 0.0
        %660 = vmatprep.subr.mxu0 0.0
        %661 = vmatpush1.msra.mxu0 0.0
        %662 = vmatprep.subr.mxu0 0.0
        %663 = vmatpush1.msra.mxu0 0.0
        %664 = vmatprep.mubr.f32.mxu0 0.0
        %665 = vmatmul.mubr.f32.gmra.mrb[0].mxu0 %v527
        %v666 = vpop.f32.mrb[0].mxu0
        %v667 = vadd.f32 %v523, %v666
        %v668 = vpop.f32.mrb[0].mxu0
        %v669 = vadd.f32 %v523, %v668
        %670 = vdwg.mxu0
        %671 = vst [vmem:[%s290] sm:$0xff] %v486
        %672 = vst [vmem:[%s290 + $0x8] sm:$0xff] %v487
        %673 = vst [vmem:[%s290 + $0x10] sm:$0xff] %v488
        %674 = vst [vmem:[%s290 + $0x18] sm:$0xff] %v489
        %675 = vst [vmem:[%s290 + $0x20] sm:$0xff] %v490
        %676 = vst [vmem:[%s290 + $0x28] sm:$0xff] %v491
        %677 = vst [vmem:[%s290 + $0x30] sm:$0xff] %v492
        %678 = vst [vmem:[%s290 + $0x38] sm:$0xff] %v493
        %679 = vst [vmem:[%s290 + $0x40] sm:$0xff] %v494
        %680 = vst [vmem:[%s290 + $0x48] sm:$0xff] %v495
        %681 = vst [vmem:[%s290 + $0x50] sm:$0xff] %v496
        %682 = vst [vmem:[%s290 + $0x58] sm:$0xff] %v497
        %683 = vst [vmem:[%s290 + $0x60] sm:$0xff] %v498
        %684 = vst [vmem:[%s290 + $0x68] sm:$0xff] %v499
        %685 = vst [vmem:[%s290 + $0x70] sm:$0xff] %v500
        %686 = vst [vmem:[%s290 + $0x78] sm:$0xff] %v501
        %687 = vst [vmem:[%s283] sm:$0xff] %v502
        %688 = vst [vmem:[%s283 + $0x8] sm:$0xff] %v503
        %689 = vst [vmem:[%s283 + $0x10] sm:$0xff] %v504
        %690 = vst [vmem:[%s283 + $0x18] sm:$0xff] %v505
        %691 = vst [vmem:[%s283 + $0x20] sm:$0xff] %v506
        %692 = vst [vmem:[%s283 + $0x28] sm:$0xff] %v507
        %693 = vst [vmem:[%s283 + $0x30] sm:$0xff] %v508
        %694 = vst [vmem:[%s283 + $0x38] sm:$0xff] %v509
        %695 = vst [vmem:[%s283 + $0x40] sm:$0xff] %v510
        %696 = vst [vmem:[%s283 + $0x48] sm:$0xff] %v511
        %697 = vst [vmem:[%s283 + $0x50] sm:$0xff] %v512
        %698 = vst [vmem:[%s283 + $0x58] sm:$0xff] %v513
        %699 = vst [vmem:[%s283 + $0x60] sm:$0xff] %v514
        %700 = vst [vmem:[%s283 + $0x68] sm:$0xff] %v515
        %701 = vst [vmem:[%s283 + $0x70] sm:$0xff] %v516
        %702 = vst [vmem:[%s283 + $0x78] sm:$0xff] %v517
        %703 = vst [vmem:[%s276] sm:$0xff] %v596
        %704 = vst [vmem:[%s276 + $0x8] sm:$0xff] %v598
        %705 = vst [vmem:[%s276 + $0x10] sm:$0xff] %v667
        %706 = vst [vmem:[%s276 + $0x18] sm:$0xff] %v669
        %s707 = sand.u32 %s143, 1
        %s708 = scalar_lea.sflag [#allocation3], %s707
        %s709 = sand.u32 %s143, 1
        %s710 = smul.addr %s709, 32
        %s711 = scalar_lea.vmem [#allocation2], %s710
        %s712 = sand.u32 %s25, 1
        %s713 = scalar_lea.sflag [#allocation5], %s712
        %s714 = sand.u32 %s169, 1
        %s715 = smul.addr %s714, 128
        %s716 = scalar_lea.vmem [#allocation4], %s715
        %s717 = sand.u32 %s25, 1
        %s718 = scalar_lea.sflag [#allocation5], %s717
        %s719 = sand.u32 %s195, 1
        %s720 = smul.addr %s719, 128
        %s721 = scalar_lea.vmem [#allocation6], %s720
        // Predicated region
        $region41: #{tpu_custom_call.1} parent=39 // pred_check
          %p722 = pneg %p153
        $region42: #{tpu_custom_call.1} parent=39 // pred_check_branch
          %724 = sbr.rel (%p722) target = $region44
        $region43: #{tpu_custom_call.1} parent=39 // pred_region
          %s725 = smul.u32 4, %s25
          %s727 = ssub.s32 512, 512
          %728 = vsyncadd %s708, %s727
          %s729 = smul.addr %s725, 128
          %s730 = scalar_lea.hbm %s5, %s729
          %s732 = sshll.u32 %s711, 4
          %s733 = int_to_ptr.vmem [resolvable:$true] %s732
          %735 = dma.vmem_to_hbm [thread:$0]  %s733, 512, %s730, %s708
        $region44: #{tpu_custom_call.1} parent=39 // pred_fallthru
          _
        // Predicated region
        $region45: #{tpu_custom_call.1} parent=39 // pred_check
          %p736 = pneg %p179
        $region46: #{tpu_custom_call.1} parent=39 // pred_check_branch
          %738 = sbr.rel (%p736) target = $region48
        $region47: #{tpu_custom_call.1} parent=39 // pred_region
          %s739 = smul.u32 4, %s25
          %s741 = ssub.s32 2048, 2048
          %742 = vsyncadd %s713, %s741
          %s743 = smul.addr %s739, 128
          %s744 = scalar_lea.hbm %s6, %s743
          %s745 = sshll.u32 %s716, 4
          %s746 = int_to_ptr.vmem [resolvable:$true] %s745
          %751 = dma.vmem_to_hbm [thread:$0]  %s746, 2048, %s744, %s713, 512, 1024, 32
        $region48: #{tpu_custom_call.1} parent=39 // pred_fallthru
          _
        // Predicated region
        $region49: #{tpu_custom_call.1} parent=39 // pred_check
          %p752 = pneg %p205
        $region50: #{tpu_custom_call.1} parent=39 // pred_check_branch
          %754 = sbr.rel (%p752) target = $region52
        $region51: #{tpu_custom_call.1} parent=39 // pred_region
          %s755 = smul.u32 4, %s25
          %s757 = ssub.s32 2048, 2048
          %758 = vsyncadd %s718, %s757
          %s759 = smul.addr %s755, 128
          %s760 = scalar_lea.hbm %s7, %s759
          %s761 = sshll.u32 %s721, 4
          %s762 = int_to_ptr.vmem [resolvable:$true] %s761
          %767 = dma.vmem_to_hbm [thread:$0]  %s762, 2048, %s760, %s718, 512, 1024, 32
        $region52: #{tpu_custom_call.1} parent=39 // pred_fallthru
          _
      $region40: #{tpu_custom_call.1} parent=5 // pred_fallthru
        _
      %p768 = scmp.le.s32.totalorder 2, %s20
      // Predicated region
      $region53: #{tpu_custom_call.1} parent=5 // pred_check
        %p769 = pneg %p768
      $region54: #{tpu_custom_call.1} parent=5 // pred_check_branch
        %771 = sbr.rel (%p769) target = $region56
      $region55: #{tpu_custom_call.1} parent=5 // pred_region
        %s772 = ssub.s32 %s20, 2
        // Predicated region
        $region57: #{tpu_custom_call.1} parent=55 // pred_check
          %p773 = pneg %p159
        $region58: #{tpu_custom_call.1} parent=55 // pred_check_branch
          %775 = sbr.rel (%p773) target = $region60
        $region59: #{tpu_custom_call.1} parent=55 // pred_region
          %s776 = sand.u32 %s144, 1
          %s777 = scalar_lea.sflag [#allocation3], %s776
          %s778 = sand.u32 %s144, 1
          %s779 = smul.addr %s778, 32
          %s780 = scalar_lea.vmem [#allocation2], %s779
          %781 = dma.done %s777, 512
        $region60: #{tpu_custom_call.1} parent=55 // pred_fallthru
          _
        // Predicated region
        $region61: #{tpu_custom_call.1} parent=55 // pred_check
          %p782 = pneg %p185
        $region62: #{tpu_custom_call.1} parent=55 // pred_check_branch
          %784 = sbr.rel (%p782) target = $region64
        $region63: #{tpu_custom_call.1} parent=55 // pred_region
          %s785 = sand.u32 %s26, 1
          %s786 = scalar_lea.sflag [#allocation5], %s785
          %s787 = sand.u32 %s170, 1
          %s788 = smul.addr %s787, 128
          %s789 = scalar_lea.vmem [#allocation4], %s788
          %790 = dma.done %s786, 2048
        $region64: #{tpu_custom_call.1} parent=55 // pred_fallthru
          _
        // Predicated region
        $region65: #{tpu_custom_call.1} parent=55 // pred_check
          %p791 = pneg %p211
        $region66: #{tpu_custom_call.1} parent=55 // pred_check_branch
          %793 = sbr.rel (%p791) target = $region68
        $region67: #{tpu_custom_call.1} parent=55 // pred_region
          %s794 = sand.u32 %s26, 1
          %s795 = scalar_lea.sflag [#allocation5], %s794
          %s796 = sand.u32 %s196, 1
          %s797 = smul.addr %s796, 128
          %s798 = scalar_lea.vmem [#allocation6], %s797
          %799 = dma.done %s795, 2048
        $region68: #{tpu_custom_call.1} parent=55 // pred_fallthru
          _
      $region56: #{tpu_custom_call.1} parent=5 // pred_fallthru
        _
    $region6: #{tpu_custom_call.1} parent=1 // loop_footer
      %s24 = sadd.s32 1, %s20
    $region7: #{tpu_custom_call.1} parent=1 // loop_footer_branch
      %19 = sbr.rel target = $region3
    $region8: #{tpu_custom_call.1} parent=1 // loop_exit
      _
    %800 = vsyncpa [#allocation3], 1
    %s801 = scalar_lea.sflag [#allocation3], 1
    %802 = vsyncpa %s801, 1
    %803 = vsyncpa [#allocation5], 1
    %s804 = scalar_lea.sflag [#allocation5], 1
    %805 = vsyncpa %s804, 1

</llo_original>
